<compile_context>
chip_gen: v6e
topology: v6e:2x2x1
jax: 0.10.0
libtpu: 0.0.40
codegen_flags: <defaults>
</compile_context>

<pallas_src>
import functools

import jax
import jax.numpy as jnp
from jax import lax
from jax.experimental import pallas as pl
from jax.experimental.pallas import tpu as pltpu


# ----------------------------------------------------------------------------
# small math helpers (usable inside Pallas kernels)
# ----------------------------------------------------------------------------
def _erf_approx(x):
    # Abramowitz & Stegun 7.1.26 polynomial erf, |abs err| < 1.5e-7.
    a1, a2, a3, a4, a5 = 0.254829592, -0.284496736, 1.421413741, -1.453152027, 1.061405429
    p = 0.3275911
    sgn = jnp.where(x >= 0.0, 1.0, -1.0)
    ax = jnp.abs(x)
    t = 1.0 / (1.0 + p * ax)
    poly = ((((a5 * t + a4) * t + a3) * t + a2) * t + a1) * t
    return sgn * (1.0 - poly * jnp.exp(-ax * ax))


def _gelu_exactish(x):
    # nn.GELU() (erf formulation); erf replaced by high-accuracy polynomial.
    return 0.5 * x * (1.0 + _erf_approx(x * 0.7071067811865476))


# ----------------------------------------------------------------------------
# Kernel 1: plain linear  y = x @ W + b
# ----------------------------------------------------------------------------
def _linear_kernel(x_ref, w_ref, b_ref, o_ref):
    acc = jnp.dot(x_ref[...], w_ref[...], preferred_element_type=jnp.float32)
    o_ref[...] = (acc + b_ref[...]).astype(o_ref.dtype)


def pallas_linear(x2d, w, b, *, tm=512):
    M, cin = x2d.shape
    cout = w.shape[1]
    tm = M if M <= tm else tm          # tm=512 (multiple of 8) or full M
    grid_m = pl.cdiv(M, tm)            # ragged tail handled by masked stores
    return pl.pallas_call(
        _linear_kernel,
        out_shape=jax.ShapeDtypeStruct((M, cout), x2d.dtype),
        grid_spec=pltpu.PrefetchScalarGridSpec(
            num_scalar_prefetch=0,
            grid=(grid_m,),
            in_specs=[
                pl.BlockSpec((tm, cin), lambda i: (i, 0)),
                pl.BlockSpec((cin, cout), lambda i: (0, 0)),
                pl.BlockSpec((1, cout), lambda i: (0, 0)),
            ],
            out_specs=pl.BlockSpec((tm, cout), lambda i: (i, 0)),
        ),
        compiler_params=pltpu.CompilerParams(dimension_semantics=("parallel",)),
    )(x2d, w, b)


# ----------------------------------------------------------------------------
# Kernel 2: fused offset + mask projection, per-group softmax over K*K points
#   - single read of x1 (both matmuls share the resident activation block)
#   - full-width softmax: subtract the per-row max (constant across each
#     group's lanes -> per-group softmax is mathematically unchanged), one exp,
#     per-group sums / broadcast via tiny indicator matmuls on the MXU.
# ----------------------------------------------------------------------------
def _offset_mask_kernel(x_ref, woff_ref, boff_ref, wmsk_ref, bmsk_ref,
                        inds_ref, indb_ref, off_ref, msk_ref):
    x = x_ref[...]
    off = jnp.dot(x, woff_ref[...], preferred_element_type=jnp.float32) + boff_ref[...]
    off_ref[...] = off.astype(off_ref.dtype)

    logits = jnp.dot(x, wmsk_ref[...], preferred_element_type=jnp.float32) + bmsk_ref[...]
    z = logits - jnp.max(logits, axis=-1, keepdims=True)
    e = jnp.exp(z)
    ssum = jnp.dot(e, inds_ref[...], preferred_element_type=jnp.float32)      # (tm, G)
    denom = jnp.dot(1.0 / ssum, indb_ref[...],
                    preferred_element_type=jnp.float32)                        # (tm, G*P)
    msk_ref[...] = (e * denom).astype(msk_ref.dtype)


def pallas_offset_mask(x2d, w_off_planar, b_off_planar, w_msk, b_msk,
                       ind_sum, ind_bcast, *, tm=512):
    M, cin = x2d.shape
    gp2 = w_off_planar.shape[1]
    gp = w_msk.shape[1]
    G = ind_sum.shape[1]
    tm = M if M <= tm else tm
    grid_m = pl.cdiv(M, tm)
    return pl.pallas_call(
        _offset_mask_kernel,
        out_shape=(jax.ShapeDtypeStruct((M, gp2), x2d.dtype),
                   jax.ShapeDtypeStruct((M, gp), x2d.dtype)),
        grid_spec=pltpu.PrefetchScalarGridSpec(
            num_scalar_prefetch=0,
            grid=(grid_m,),
            in_specs=[
                pl.BlockSpec((tm, cin), lambda i: (i, 0)),
                pl.BlockSpec((cin, gp2), lambda i: (0, 0)),
                pl.BlockSpec((1, gp2), lambda i: (0, 0)),
                pl.BlockSpec((cin, gp), lambda i: (0, 0)),
                pl.BlockSpec((1, gp), lambda i: (0, 0)),
                pl.BlockSpec((gp, G), lambda i: (0, 0)),
                pl.BlockSpec((G, gp), lambda i: (0, 0)),
            ],
            out_specs=[
                pl.BlockSpec((tm, gp2), lambda i: (i, 0)),
                pl.BlockSpec((tm, gp), lambda i: (i, 0)),
            ],
        ),
        compiler_params=pltpu.CompilerParams(dimension_semantics=("parallel",)),
    )(x2d, w_off_planar, b_off_planar, w_msk, b_msk, ind_sum, ind_bcast)


# ----------------------------------------------------------------------------
# Kernel 3: depthwise conv (stride 1) + LayerNorm(C) + GELU
#   zero-padding is done in a VMEM scratch inside the kernel -> no padded copy
#   of the activation in HBM.
# ----------------------------------------------------------------------------
def _dwconv_ln_gelu_kernel(x_ref, w_ref, b_ref, g_ref, bt_ref, o_ref, xp_ref,
                           *, H, W, K, pad, eps):
    C = o_ref.shape[-1]
    xp_ref[...] = jnp.zeros_like(xp_ref)
    xp_ref[pad:pad + H, pad:pad + W, :] = x_ref[0].astype(jnp.float32)
    xp = xp_ref[...]                             # (H+2p, W+2p, C)

    wmat = w_ref[...].astype(jnp.float32)        # (K*K, C)
    acc = jnp.zeros((H, W, C), jnp.float32)
    for kh in range(K):
        for kw in range(K):
            patch = xp[kh:kh + H, kw:kw + W, :]
            wk = wmat[kh * K + kw:kh * K + kw + 1, :].reshape(1, 1, C)
            acc = acc + patch * wk
    acc = acc + b_ref[...].reshape(1, 1, C)
    # LayerNorm over channels (eps inside sqrt, biased variance, like nn.LayerNorm)
    mean = jnp.mean(acc, axis=-1, keepdims=True)
    var = jnp.mean((acc - mean) ** 2, axis=-1, keepdims=True)
    y = (acc - mean) * lax.rsqrt(var + eps)
    y = y * g_ref[...].reshape(1, 1, C) + bt_ref[...].reshape(1, 1, C)
    y = _gelu_exactish(y)
    o_ref[0] = y.astype(o_ref.dtype)


def pallas_dwconv_ln_gelu(x, dw_w, dw_b, ln_g, ln_b, *, K, eps=1e-6):
    N, H, W, C = x.shape
    pad = (K - 1) // 2
    kernel = functools.partial(_dwconv_ln_gelu_kernel, H=H, W=W, K=K, pad=pad, eps=eps)
    return pl.pallas_call(
        kernel,
        out_shape=jax.ShapeDtypeStruct((N, H, W, C), x.dtype),
        grid_spec=pltpu.PrefetchScalarGridSpec(
            num_scalar_prefetch=0,
            grid=(N,),
            in_specs=[
                pl.BlockSpec((1, H, W, C), lambda n: (n, 0, 0, 0)),
                pl.BlockSpec((K * K, C), lambda n: (0, 0)),
                pl.BlockSpec((1, C), lambda n: (0, 0)),
                pl.BlockSpec((1, C), lambda n: (0, 0)),
                pl.BlockSpec((1, C), lambda n: (0, 0)),
            ],
            out_specs=pl.BlockSpec((1, H, W, C), lambda n: (n, 0, 0, 0)),
            scratch_shapes=[pltpu.VMEM((H + 2 * pad, W + 2 * pad, C), jnp.float32)],
        ),
        compiler_params=pltpu.CompilerParams(
            dimension_semantics=("parallel",),
            vmem_limit_bytes=48 * 1024 * 1024),
    )(x, dw_w, dw_b, ln_g, ln_b)


# ----------------------------------------------------------------------------
# Kernel 4: DCNv3 deformable sampling core (tiled over output pixels)
#   Output pixels live on the 128-lane axis.  Per (group, point) we build a
#   row "tent" (H_in, tile) and a mask-weighted col "tent" (W_in, tile) — the
#   tent max(0, 1 - |iota - pos|) IS the bilinear weight, with out-of-range
#   taps getting weight 0 automatically (same border handling as the CUDA
#   kernel) — accumulate their outer product into a lane-dense
#   (H_in, W_in, tile) sampling slab, and contract it with the group's value
#   slice on the MXU.  Results are assembled in a (tile, C) scratch and stored
#   once, lane-dense.
# ----------------------------------------------------------------------------
def _dcnv3_core_kernel(x_ref, offx_ref, offy_ref, mask_ref, o_ref, acc_ref, *,
                       H_in, W_in, W_out, tile_hwo, K_h, K_w,
                       stride_h, stride_w, pad_h, pad_w, dil_h, dil_w,
                       group, group_channels, offset_scale):
    P = K_h * K_w
    HWi = H_in * W_in
    t = pl.program_id(1)

    x = x_ref[0].astype(jnp.float32)        # (HWi, C)
    offx = offx_ref[0].astype(jnp.float32)  # (G*P, tile)
    offy = offy_ref[0].astype(jnp.float32)  # (G*P, tile)
    msk = mask_ref[0].astype(jnp.float32)   # (G*P, tile)

    # output-pixel coordinates for this tile, as lane vectors (1, tile)
    oi = (t * tile_hwo
          + lax.broadcasted_iota(jnp.int32, (1, tile_hwo), 1)).astype(jnp.float32)
    h_out = jnp.floor((oi + 0.5) * (1.0 / float(W_out)))   # +0.5 -> robust floor
    w_out = oi - h_out * float(W_out)

    os_ = float(offset_scale)
    ph0 = float((dil_h * (K_h - 1)) // 2)
    pw0 = float((dil_w * (K_w - 1)) // 2)

    # loop-invariant parts of the sampling positions:
    #   pos = base(out pixel) + offset_scale*(k*dil) + offset_scale*offset
    xbase = w_out * float(stride_w) - float(pad_w) + pw0 * (1.0 - os_)   # (1, tile)
    ybase = h_out * float(stride_h) - float(pad_h) + ph0 * (1.0 - os_)   # (1, tile)
    pos_x_all = xbase + os_ * offx                                       # (G*P, tile)
    pos_y_all = ybase + os_ * offy                                       # (G*P, tile)

    # float iotas for the tent (bilinear) weights
    r_iota = lax.broadcasted_iota(jnp.int32, (H_in, tile_hwo), 0).astype(jnp.float32)
    c_iota = lax.broadcasted_iota(jnp.int32, (W_in, tile_hwo), 0).astype(jnp.float32)

    for g in range(group):
        a_t = jnp.zeros((H_in, W_in, tile_hwo), jnp.float32)
        for p in range(P):
            kw = p // K_h          # reference ordering: kw-major, kh-minor
            kh = p % K_h
            col = g * P + p
            pos_x = pos_x_all[col:col + 1, :] + (os_ * float(kw * dil_w))  # (1, tile)
            pos_y = pos_y_all[col:col + 1, :] + (os_ * float(kh * dil_h))  # (1, tile)
            # separable bilinear "tent" weights; out-of-range rows/cols -> 0.
            row_mix = jnp.maximum(1.0 - jnp.abs(r_iota - pos_y), 0.0)      # (H_in, tile)
            col_mix = msk[col:col + 1, :] * jnp.maximum(
                1.0 - jnp.abs(c_iota - pos_x), 0.0)                        # (W_in, tile)
            a_t = a_t + row_mix[:, None, :] * col_mix[None, :, :]
        a_flat = a_t.reshape(HWi, tile_hwo)                                # (HWi, tile)
        xg = x[:, g * group_channels:(g + 1) * group_channels]             # (HWi, Cg)
        out_g = jnp.dot(a_flat.T, xg, preferred_element_type=jnp.float32)  # (tile, Cg)
        acc_ref[:, g * group_channels:(g + 1) * group_channels] = out_g
    o_ref[0] = acc_ref[...].astype(o_ref.dtype)


def pallas_dcnv3_core(x_flat, offx, offy, mask_t, *, H_in, W_in, H_out, W_out,
                      K, stride, pad, dilation, group, group_channels,
                      offset_scale, tile_hwo=256):
    N, HWi, C = x_flat.shape
    GP = offx.shape[1]
    HWo = offx.shape[2]
    tile = min(tile_hwo, HWo)
    if tile < HWo:
        tile = max(128, (tile // 128) * 128)   # last-dim blocks 128-aligned
    grid_t = pl.cdiv(HWo, tile)
    kernel = functools.partial(
        _dcnv3_core_kernel, H_in=H_in, W_in=W_in, W_out=W_out, tile_hwo=tile,
        K_h=K, K_w=K, stride_h=stride, stride_w=stride, pad_h=pad, pad_w=pad,
        dil_h=dilation, dil_w=dilation, group=group,
        group_channels=group_channels, offset_scale=offset_scale)
    return pl.pallas_call(
        kernel,
        out_shape=jax.ShapeDtypeStruct((N, HWo, C), x_flat.dtype),
        grid_spec=pltpu.PrefetchScalarGridSpec(
            num_scalar_prefetch=0,
            grid=(N, grid_t),
            in_specs=[
                pl.BlockSpec((1, HWi, C), lambda n, t: (n, 0, 0)),
                pl.BlockSpec((1, GP, tile), lambda n, t: (n, 0, t)),
                pl.BlockSpec((1, GP, tile), lambda n, t: (n, 0, t)),
                pl.BlockSpec((1, GP, tile), lambda n, t: (n, 0, t)),
            ],
            out_specs=pl.BlockSpec((1, tile, C), lambda n, t: (n, t, 0)),
            scratch_shapes=[pltpu.VMEM((tile, C), jnp.float32)],
        ),
        compiler_params=pltpu.CompilerParams(
            dimension_semantics=("parallel", "parallel"),
            vmem_limit_bytes=48 * 1024 * 1024),
    )(x_flat, offx, offy, mask_t)


# ----------------------------------------------------------------------------
# DCNv3 module (Pallas) — parameters initialised like the PyTorch module:
#   offset / mask linears: zeros ; input/output proj: xavier_uniform, bias 0 ;
#   depthwise conv: uniform(+-1/sqrt(fan_in)) ; LayerNorm: gamma=1, beta=0.
# ----------------------------------------------------------------------------
class DCNv3Pallas:
    def __init__(self, channels=64, kernel_size=3, dw_kernel_size=None, stride=1,
                 pad=1, dilation=1, group=4, offset_scale=1.0,
                 center_feature_scale=False, key=None):
        assert channels % group == 0
        self.channels = channels
        self.kernel_size = kernel_size
        self.dw_kernel_size = dw_kernel_size if dw_kernel_size is not None else kernel_size
        self.stride = stride
        self.pad = pad
        self.dilation = dilation
        self.group = group
        self.group_channels = channels // group
        self.offset_scale = offset_scale
        self.center_feature_scale = center_feature_scale
        # TODO(synk): center_feature_scale branch not implemented (module default is False).

        P = kernel_size * kernel_size
        k1, k2, k3, k4 = jax.random.split(key, 4)
        a = (3.0 / channels) ** 0.5  # xavier_uniform bound for square weight
        f32 = jnp.float32
        self.w_in = jax.random.uniform(k1, (channels, channels), f32, -a, a)
        self.b_in = jnp.zeros((1, channels), f32)
        self.w_out = jax.random.uniform(k2, (channels, channels), f32, -a, a)
        self.b_out = jnp.zeros((1, channels), f32)
        self.w_off = jnp.zeros((channels, group * P * 2), f32)
        self.b_off = jnp.zeros((1, group * P * 2), f32)
        self.w_msk = jnp.zeros((channels, group * P), f32)
        self.b_msk = jnp.zeros((1, group * P), f32)
        bdw = 1.0 / float(self.dw_kernel_size)  # 1/sqrt(fan_in), fan_in = k*k
        self.dw_w = jax.random.uniform(k3, (self.dw_kernel_size ** 2, channels), f32, -bdw, bdw)
        self.dw_b = jax.random.uniform(k4, (1, channels), f32, -bdw, bdw)
        self.ln_g = jnp.ones((1, channels), f32)
        self.ln_b = jnp.zeros((1, channels), f32)

    # ------------------------- Pallas forward -------------------------
    def __call__(self, x):
        inp, depth = x
        N, H, W, C = inp.shape
        assert C == self.channels
        M = N * H * W
        G = self.group
        P = self.kernel_size * self.kernel_size
        GP = G * P

        x_proj = pallas_linear(inp.reshape(M, C), self.w_in, self.b_in)

        # depthwise conv + LN + GELU (padding done inside the kernel)
        x1 = pallas_dwconv_ln_gelu(inp, self.dw_w, self.dw_b, self.ln_g, self.ln_b,
                                   K=self.dw_kernel_size)
        x1f = x1.reshape(M, C)

        # fused offset + mask projection; offset weight columns reordered to
        # planar (all-x | all-y) order so the core kernel reads stride-1 columns.
        w_off_planar = jnp.concatenate([self.w_off[:, 0::2], self.w_off[:, 1::2]], axis=1)
        b_off_planar = jnp.concatenate([self.b_off[:, 0::2], self.b_off[:, 1::2]], axis=1)
        ind_sum = (jnp.arange(GP)[:, None] // P == jnp.arange(G)[None, :]).astype(jnp.float32)
        ind_bcast = ind_sum.T
        offset_planar, mask = pallas_offset_mask(
            x1f, w_off_planar, b_off_planar, self.w_msk, self.b_msk,
            ind_sum, ind_bcast)

        eff = self.dilation * (self.kernel_size - 1) + 1
        H_out = (H + 2 * self.pad - eff) // self.stride + 1
        W_out = (W + 2 * self.pad - eff) // self.stride + 1
        assert H_out == H and W_out == W, "DCNv3 computes offset/mask at input resolution"
        HWo = H_out * W_out

        # layout plumbing (one-time XLA transposes): per-(g,p) columns become
        # lane vectors over output pixels for the core kernel.
        offp = offset_planar.reshape(N, HWo, 2 * GP)
        offx = jnp.transpose(offp[:, :, :GP], (0, 2, 1))           # (N, GP, HWo)
        offy = jnp.transpose(offp[:, :, GP:], (0, 2, 1))           # (N, GP, HWo)
        mask_t = jnp.transpose(mask.reshape(N, HWo, GP), (0, 2, 1))  # (N, GP, HWo)

        x_dcn = pallas_dcnv3_core(
            x_proj.reshape(N, H * W, C), offx, offy, mask_t,
            H_in=H, W_in=W, H_out=H_out, W_out=W_out, K=self.kernel_size,
            stride=self.stride, pad=self.pad, dilation=self.dilation,
            group=self.group, group_channels=self.group_channels,
            offset_scale=self.offset_scale)

        out = pallas_linear(x_dcn.reshape(N * HWo, C), self.w_out, self.b_out)
        return out.reshape(N, H_out, W_out, C), depth

    # ------------------ pure-JAX reference (for checking) ------------------
    def reference(self, x):
        inp, depth = x
        N, H, W, C = inp.shape
        G, Cg, K = self.group, self.group_channels, self.kernel_size
        P = K * K
        s, pad, dil, os_ = self.stride, self.pad, self.dilation, self.offset_scale
        dwk = self.dw_kernel_size
        hi = lax.Precision.HIGHEST

        xp_lin = jnp.dot(inp.reshape(-1, C), self.w_in, precision=hi) + self.b_in[0]
        x_proj = xp_lin.reshape(N, H, W, C)

        pdw = (dwk - 1) // 2
        xp = jnp.pad(inp, ((0, 0), (pdw, pdw), (pdw, pdw), (0, 0)))
        acc = jnp.zeros((N, H, W, C), jnp.float32)
        for kh in range(dwk):
            for kw in range(dwk):
                acc = acc + xp[:, kh:kh + H, kw:kw + W, :] * self.dw_w[kh * dwk + kw][None, None, None, :]
        acc = acc + self.dw_b[0]
        mean = jnp.mean(acc, -1, keepdims=True)
        var = jnp.mean((acc - mean) ** 2, -1, keepdims=True)
        y = (acc - mean) / jnp.sqrt(var + 1e-6)
        y = y * self.ln_g[0] + self.ln_b[0]
        x1 = jax.nn.gelu(y, approximate=False)

        offset = (jnp.dot(x1.reshape(-1, C), self.w_off, precision=hi) + self.b_off[0]).reshape(N, H, W, G * P * 2)
        mlog = (jnp.dot(x1.reshape(-1, C), self.w_msk, precision=hi) + self.b_msk[0]).reshape(N, H, W, G, P)
        mask = jax.nn.softmax(mlog, -1).reshape(N, H, W, G * P)

        eff = dil * (K - 1) + 1
        H_out = (H + 2 * pad - eff) // s + 1
        W_out = (W + 2 * pad - eff) // s + 1
        HWo = H_out * W_out
        xg = x_proj.reshape(N, H * W, G, Cg)
        off = offset.reshape(N, HWo, G, P, 2)
        msk = mask.reshape(N, HWo, G, P)
        oi = jnp.arange(HWo)
        h_o = (oi // W_out).astype(jnp.float32)[None, :, None, None]
        w_o = (oi % W_out).astype(jnp.float32)[None, :, None, None]
        pidx = jnp.arange(P)
        kw_i = (pidx // K).astype(jnp.float32)[None, None, None, :]
        kh_i = (pidx % K).astype(jnp.float32)[None, None, None, :]
        ph0 = (dil * (K - 1)) // 2
        pw0 = (dil * (K - 1)) // 2
        x_f = w_o * s - pad + pw0 * (1 - os_) + os_ * kw_i * dil + os_ * off[..., 0]
        y_f = h_o * s - pad + ph0 * (1 - os_) + os_ * kh_i * dil + os_ * off[..., 1]
        x0 = jnp.floor(x_f); y0 = jnp.floor(y_f)
        lx = x_f - x0; ly = y_f - y0
        x0i = x0.astype(jnp.int32); y0i = y0.astype(jnp.int32)
        n_i = jnp.arange(N)[:, None, None, None]
        g_i = jnp.arange(G)[None, None, :, None]
        out = jnp.zeros((N, HWo, G, Cg), jnp.float32)
        for dy, dx, wgt in ((0, 0, (1 - ly) * (1 - lx)), (0, 1, (1 - ly) * lx),
                            (1, 0, ly * (1 - lx)), (1, 1, ly * lx)):
            xi = x0i + dx; yi = y0i + dy
            valid = ((xi >= 0) & (xi < W) & (yi >= 0) & (yi < H)).astype(jnp.float32)
            idx = jnp.clip(yi, 0, H - 1) * W + jnp.clip(xi, 0, W - 1)
            gathered = xg[n_i, idx, g_i]                      # (N, HWo, G, P, Cg)
            out = out + jnp.sum((wgt * valid * msk)[..., None] * gathered, axis=3)
        x_dcn = out.reshape(N * HWo, C)
        o = jnp.dot(x_dcn, self.w_out, precision=hi) + self.b_out[0]
        return o.reshape(N, H_out, W_out, C), depth


# ----------------------------------------------------------------------------
if __name__ == "__main__":
    N, H, W, C = 2, 16, 16, 32
    group = 4

    root = jax.random.PRNGKey(0)
    k_mod, k_w, k_in = jax.random.split(root, 3)

    module = DCNv3Pallas(channels=C, kernel_size=3, stride=1, pad=1, dilation=1,
                         group=group, offset_scale=1.0, key=k_mod)

    # Give offset / mask non-trivial weights so the deformable sampling and the
    # segmented softmax paths are actually exercised (the PyTorch init is zeros,
    # which would degenerate to a uniform-mask regular grid).
    ko, kb, km, kc = jax.random.split(k_w, 4)
    module.w_off = 0.2 * jax.random.normal(ko, module.w_off.shape, jnp.float32)
    module.b_off = 0.1 * jax.random.normal(kb, module.b_off.shape, jnp.float32)
    module.w_msk = 0.3 * jax.random.normal(km, module.w_msk.shape, jnp.float32)
    module.b_msk = 0.1 * jax.random.normal(kc, module.b_msk.shape, jnp.float32)

    kx, kd = jax.random.split(k_in)
    inp = jax.random.normal(kx, (N, H, W, C), jnp.float32)
    depth = jax.random.normal(kd, (N, 1, H, W), jnp.float32)

    out, depth_out = module((inp, depth))
    out = jax.block_until_ready(out)

    assert out.shape == (N, H, W, C)
    assert bool(jnp.all(jnp.isfinite(out)))

    ref_out, _ = module.reference((inp, depth))
    max_err = float(jnp.max(jnp.abs(out - ref_out)))
    assert max_err < 2e-3, f"max abs err vs reference: {max_err}"

    print("KERNEL_OK")
</pallas_src>

<mosaic_0001>
module attributes {stable_mosaic.version = 11 : i64} {
  func.func @_linear_kernel(%arg0: i32, %arg1: memref<512x32xf32, #tpu.memory_space<vmem>>, %arg2: memref<32x32xf32, #tpu.memory_space<vmem>>, %arg3: memref<1x32xf32, #tpu.memory_space<vmem>>, %arg4: memref<512x32xf32, #tpu.memory_space<vmem>>) attributes {dimension_semantics = [#tpu.dimension_semantics<parallel>], iteration_bounds = array<i64: 1>, scalar_prefetch = 0 : i64, scratch_operands = 0 : i64, tpu.core_type = #tpu.core_type<tc>, window_params = [{transform_indices = @transform_0, window_bounds = array<i64: 512, 32>}, {pipeline_mode = #tpu.pipeline_mode<synchronous>, transform_indices = @transform_1, window_bounds = array<i64: 32, 32>}, {pipeline_mode = #tpu.pipeline_mode<synchronous>, transform_indices = @transform_2, window_bounds = array<i64: 1, 32>}, {transform_indices = @transform_3, window_bounds = array<i64: 512, 32>}]} {
    %c0 = arith.constant 0 : index
    %c0_0 = arith.constant 0 : index
    %0 = vector.load %arg1[%c0, %c0_0] : memref<512x32xf32, #tpu.memory_space<vmem>>, vector<512x32xf32>
    %c0_1 = arith.constant 0 : index
    %c0_2 = arith.constant 0 : index
    %1 = vector.load %arg2[%c0_1, %c0_2] : memref<32x32xf32, #tpu.memory_space<vmem>>, vector<32x32xf32>
    %cst = arith.constant dense<0.000000e+00> : vector<512x32xf32>
    %2 = tpu.matmul %0, %1, %cst {dimension_numbers = #tpu.dot_dimension_numbers<[1], [0], [0], [1], [0, 0, 1, 1], [], []>} : vector<512x32xf32>, vector<32x32xf32>, vector<512x32xf32> -> vector<512x32xf32>
    %c0_3 = arith.constant 0 : index
    %c0_4 = arith.constant 0 : index
    %3 = vector.load %arg3[%c0_3, %c0_4] : memref<1x32xf32, #tpu.memory_space<vmem>>, vector<1x32xf32>
    %4 = vector.broadcast %3 : vector<1x32xf32> to vector<512x32xf32>
    %5 = arith.addf %2, %4 : vector<512x32xf32>
    %c0_5 = arith.constant 0 : index
    %c0_6 = arith.constant 0 : index
    %6 = vector.load %arg4[%c0_5, %c0_6] : memref<512x32xf32, #tpu.memory_space<vmem>>, vector<512x32xf32>
    tpu.vector_store %arg4[%c0_5, %c0_6], %5 {strides = array<i32>} : memref<512x32xf32, #tpu.memory_space<vmem>>, vector<512x32xf32>,
    return
  }
  func.func @transform_0(%arg0: i32) -> (i32, i32) {
    %c0_i32 = arith.constant 0 : i32
    %c0_i32_0 = arith.constant 0 : i32
    return %arg0, %c0_i32 : i32, i32
  }
  func.func @transform_1(%arg0: i32) -> (i32, i32) {
    %c0_i32 = arith.constant 0 : i32
    %c0_i32_0 = arith.constant 0 : i32
    %c0_i32_1 = arith.constant 0 : i32
    return %c0_i32, %c0_i32_0 : i32, i32
  }
  func.func @transform_2(%arg0: i32) -> (i32, i32) {
    %c0_i32 = arith.constant 0 : i32
    %c0_i32_0 = arith.constant 0 : i32
    %c0_i32_1 = arith.constant 0 : i32
    return %c0_i32, %c0_i32_0 : i32, i32
  }
  func.func @transform_3(%arg0: i32) -> (i32, i32) {
    %c0_i32 = arith.constant 0 : i32
    %c0_i32_0 = arith.constant 0 : i32
    return %arg0, %c0_i32 : i32, i32
  }
}

</mosaic_0001>

<llo_original>
// kernel: tpu_custom_call.1
$region0: #{tpu_custom_call.1}
  #allocation0 [shape = 'u32[]', space=smem, size = 0x4, offset = 0x4, fixed_abs, tag = 'smem constant byte address 0x4 - core index']
  #allocation1 [shape = 'u32[144,128]{1,0:T(1,128)}', space=vmem, size = 0x12000, scoped, tag = 'internal scratch']
  %s0 = inlined_call_operand.vmem [shape: f32[512,32], index: 0, kind: input, shape index: {}]
  %s1 = inlined_call_operand.vmem [shape: f32[32,32], index: 1, kind: input, shape index: {}]
  %s2 = inlined_call_operand.vmem [shape: f32[1,32], index: 2, kind: input, shape index: {}]
  %s3 = inlined_call_operand.vmem [shape: f32[512,32], index: 3, kind: output, shape index: {}]
  %s4 = sld [smem:[#allocation0]]
  $region22: #{tpu_custom_call.1} parent=0
    _
  %s6 = ssub.s32 1, %s4
  %s7 = scalar_select 0, %s6, %s4
  // Predicated region
  $region2: #{tpu_custom_call.1} parent=0 // pred_check
    _
  $region3: #{tpu_custom_call.1} parent=0 // pred_check_branch
    %9 = sbr.rel (0) target = $region5
  $region4: #{tpu_custom_call.1} parent=0 // pred_region
    _
  $region5: #{tpu_custom_call.1} parent=0 // pred_fallthru
    _
  // Predicated region
  $region6: #{tpu_custom_call.1} parent=0 // pred_check
    _
  $region7: #{tpu_custom_call.1} parent=0 // pred_check_branch
    %11 = sbr.rel (0) target = $region9
  $region8: #{tpu_custom_call.1} parent=0 // pred_region
    _
  $region9: #{tpu_custom_call.1} parent=0 // pred_fallthru
    _
  // Predicated region
  $region10: #{tpu_custom_call.1} parent=0 // pred_check
    _
  $region11: #{tpu_custom_call.1} parent=0 // pred_check_branch
    %13 = sbr.rel (0) target = $region13
  $region12: #{tpu_custom_call.1} parent=0 // pred_region
    _
  $region13: #{tpu_custom_call.1} parent=0 // pred_fallthru
    _
  %v14 = vld [vmem:[%s0] sm:$0xff]
  %v15 = vld [vmem:[%s0 + $0x8] sm:$0xff]
  %v16 = vld [vmem:[%s0 + $0x10] sm:$0xff]
  %v17 = vld [vmem:[%s0 + $0x18] sm:$0xff]
  %v18 = vld [vmem:[%s0 + $0x20] sm:$0xff]
  %v19 = vld [vmem:[%s0 + $0x28] sm:$0xff]
  %v20 = vld [vmem:[%s0 + $0x30] sm:$0xff]
  %v21 = vld [vmem:[%s0 + $0x38] sm:$0xff]
  %v22 = vld [vmem:[%s0 + $0x40] sm:$0xff]
  %v23 = vld [vmem:[%s0 + $0x48] sm:$0xff]
  %v24 = vld [vmem:[%s0 + $0x50] sm:$0xff]
  %v25 = vld [vmem:[%s0 + $0x58] sm:$0xff]
  %v26 = vld [vmem:[%s0 + $0x60] sm:$0xff]
  %v27 = vld [vmem:[%s0 + $0x68] sm:$0xff]
  %v28 = vld [vmem:[%s0 + $0x70] sm:$0xff]
  %v29 = vld [vmem:[%s0 + $0x78] sm:$0xff]
  %v30 = vld [vmem:[%s0 + $0x80] sm:$0xff]
  %v31 = vld [vmem:[%s0 + $0x88] sm:$0xff]
  %v32 = vld [vmem:[%s0 + $0x90] sm:$0xff]
  %v33 = vld [vmem:[%s0 + $0x98] sm:$0xff]
  %v34 = vld [vmem:[%s0 + $0xa0] sm:$0xff]
  %v35 = vld [vmem:[%s0 + $0xa8] sm:$0xff]
  %v36 = vld [vmem:[%s0 + $0xb0] sm:$0xff]
  %v37 = vld [vmem:[%s0 + $0xb8] sm:$0xff]
  %v38 = vld [vmem:[%s0 + $0xc0] sm:$0xff]
  %v39 = vld [vmem:[%s0 + $0xc8] sm:$0xff]
  %v40 = vld [vmem:[%s0 + $0xd0] sm:$0xff]
  %v41 = vld [vmem:[%s0 + $0xd8] sm:$0xff]
  %v42 = vld [vmem:[%s0 + $0xe0] sm:$0xff]
  %v43 = vld [vmem:[%s0 + $0xe8] sm:$0xff]
  %v44 = vld [vmem:[%s0 + $0xf0] sm:$0xff]
  %v45 = vld [vmem:[%s0 + $0xf8] sm:$0xff]
  %v46 = vld [vmem:[%s0 + $0x100] sm:$0xff]
  %v47 = vld [vmem:[%s0 + $0x108] sm:$0xff]
  %v48 = vld [vmem:[%s0 + $0x110] sm:$0xff]
  %v49 = vld [vmem:[%s0 + $0x118] sm:$0xff]
  %v50 = vld [vmem:[%s0 + $0x120] sm:$0xff]
  %v51 = vld [vmem:[%s0 + $0x128] sm:$0xff]
  %v52 = vld [vmem:[%s0 + $0x130] sm:$0xff]
  %v53 = vld [vmem:[%s0 + $0x138] sm:$0xff]
  %v54 = vld [vmem:[%s0 + $0x140] sm:$0xff]
  %v55 = vld [vmem:[%s0 + $0x148] sm:$0xff]
  %v56 = vld [vmem:[%s0 + $0x150] sm:$0xff]
  %v57 = vld [vmem:[%s0 + $0x158] sm:$0xff]
  %v58 = vld [vmem:[%s0 + $0x160] sm:$0xff]
  %v59 = vld [vmem:[%s0 + $0x168] sm:$0xff]
  %v60 = vld [vmem:[%s0 + $0x170] sm:$0xff]
  %v61 = vld [vmem:[%s0 + $0x178] sm:$0xff]
  %v62 = vld [vmem:[%s0 + $0x180] sm:$0xff]
  %v63 = vld [vmem:[%s0 + $0x188] sm:$0xff]
  %v64 = vld [vmem:[%s0 + $0x190] sm:$0xff]
  %v65 = vld [vmem:[%s0 + $0x198] sm:$0xff]
  %v66 = vld [vmem:[%s0 + $0x1a0] sm:$0xff]
  %v67 = vld [vmem:[%s0 + $0x1a8] sm:$0xff]
  %v68 = vld [vmem:[%s0 + $0x1b0] sm:$0xff]
  %v69 = vld [vmem:[%s0 + $0x1b8] sm:$0xff]
  %v70 = vld [vmem:[%s0 + $0x1c0] sm:$0xff]
  %v71 = vld [vmem:[%s0 + $0x1c8] sm:$0xff]
  %v72 = vld [vmem:[%s0 + $0x1d0] sm:$0xff]
  %v73 = vld [vmem:[%s0 + $0x1d8] sm:$0xff]
  %v74 = vld [vmem:[%s0 + $0x1e0] sm:$0xff]
  %v75 = vld [vmem:[%s0 + $0x1e8] sm:$0xff]
  %v76 = vld [vmem:[%s0 + $0x1f0] sm:$0xff]
  %v77 = vld [vmem:[%s0 + $0x1f8] sm:$0xff]
  %v78 = vld [vmem:[%s1] sm:$0xff]
  %v79 = vld [vmem:[%s1 + $0x8] sm:$0xff]
  %v80 = vld [vmem:[%s1 + $0x10] sm:$0xff]
  %v81 = vld [vmem:[%s1 + $0x18] sm:$0xff]
  %v82 = vld [vmem:[%s2] sm:$0x1]
  %v84 = vlaneseq
  %v85 = vshrl.u32 %v84, 7
  %v86 = vsub.s32 0, %v85
  %v87 = vrot.slane %v82, %v86
  %vm89 = vcmask 261120
  %v91 = vsel %vm89, %v14, 0
  %v94 = vsel %vm89, %v15, 0
  %v97 = vsel %vm89, %v16, 0
  %v100 = vsel %vm89, %v17, 0
  %v103 = vsel %vm89, %v18, 0
  %v106 = vsel %vm89, %v19, 0
  %v109 = vsel %vm89, %v20, 0
  %v112 = vsel %vm89, %v21, 0
  %v115 = vsel %vm89, %v22, 0
  %v118 = vsel %vm89, %v23, 0
  %v121 = vsel %vm89, %v24, 0
  %v124 = vsel %vm89, %v25, 0
  %v127 = vsel %vm89, %v26, 0
  %v130 = vsel %vm89, %v27, 0
  %v133 = vsel %vm89, %v28, 0
  %v136 = vsel %vm89, %v29, 0
  %v139 = vsel %vm89, %v30, 0
  %v142 = vsel %vm89, %v31, 0
  %v145 = vsel %vm89, %v32, 0
  %v148 = vsel %vm89, %v33, 0
  %v151 = vsel %vm89, %v34, 0
  %v154 = vsel %vm89, %v35, 0
  %v157 = vsel %vm89, %v36, 0
  %v160 = vsel %vm89, %v37, 0
  %v163 = vsel %vm89, %v38, 0
  %v166 = vsel %vm89, %v39, 0
  %v169 = vsel %vm89, %v40, 0
  %v172 = vsel %vm89, %v41, 0
  %v175 = vsel %vm89, %v42, 0
  %v178 = vsel %vm89, %v43, 0
  %v181 = vsel %vm89, %v44, 0
  %v184 = vsel %vm89, %v45, 0
  %v187 = vsel %vm89, %v46, 0
  %v190 = vsel %vm89, %v47, 0
  %v193 = vsel %vm89, %v48, 0
  %v196 = vsel %vm89, %v49, 0
  %v199 = vsel %vm89, %v50, 0
  %v202 = vsel %vm89, %v51, 0
  %v205 = vsel %vm89, %v52, 0
  %v208 = vsel %vm89, %v53, 0
  %v211 = vsel %vm89, %v54, 0
  %v214 = vsel %vm89, %v55, 0
  %v217 = vsel %vm89, %v56, 0
  %v220 = vsel %vm89, %v57, 0
  %v223 = vsel %vm89, %v58, 0
  %v226 = vsel %vm89, %v59, 0
  %v229 = vsel %vm89, %v60, 0
  %v232 = vsel %vm89, %v61, 0
  %v235 = vsel %vm89, %v62, 0
  %v238 = vsel %vm89, %v63, 0
  %v241 = vsel %vm89, %v64, 0
  %v244 = vsel %vm89, %v65, 0
  %v247 = vsel %vm89, %v66, 0
  %v250 = vsel %vm89, %v67, 0
  %v253 = vsel %vm89, %v68, 0
  %v256 = vsel %vm89, %v69, 0
  %v259 = vsel %vm89, %v70, 0
  %v262 = vsel %vm89, %v71, 0
  %v265 = vsel %vm89, %v72, 0
  %v268 = vsel %vm89, %v73, 0
  %v271 = vsel %vm89, %v74, 0
  %v274 = vsel %vm89, %v75, 0
  %v277 = vsel %vm89, %v76, 0
  %v280 = vsel %vm89, %v77, 0
  %282 = vmatprep.subr.mxu0 0.0
  %283 = vmatpush1.msra.mxu0 0.0
  %284 = vmatprep.subr.mxu0 0.0
  %285 = vmatpush1.msra.mxu0 0.0
  %286 = vmatprep.subr.mxu0 0.0
  %287 = vmatpush1.msra.mxu0 0.0
  %288 = vmatprep.subr.mxu0 0.0
  %289 = vmatpush1.msra.mxu0 0.0
  %290 = vmatprep.subr.mxu0 0.0
  %291 = vmatpush1.msra.mxu0 0.0
  %292 = vmatprep.subr.mxu0 0.0
  %293 = vmatpush1.msra.mxu0 0.0
  %294 = vmatprep.subr.mxu0 0.0
  %295 = vmatpush1.msra.mxu0 0.0
  %296 = vmatprep.subr.mxu0 0.0
  %297 = vmatpush1.msra.mxu0 0.0
  %298 = vmatprep.subr.mxu0 0.0
  %299 = vmatpush1.msra.mxu0 0.0
  %300 = vmatprep.subr.mxu0 0.0
  %301 = vmatpush1.msra.mxu0 0.0
  %302 = vmatprep.subr.mxu0 0.0
  %303 = vmatpush1.msra.mxu0 0.0
  %304 = vmatprep.subr.mxu0 0.0
  %305 = vmatpush1.msra.mxu0 0.0
  %306 = vmatprep.subr.mxu0 0.0
  %307 = vmatpush1.msra.mxu0 %v81
  %308 = vmatprep.subr.mxu0 0.0
  %309 = vmatpush1.msra.mxu0 %v80
  %310 = vmatprep.subr.mxu0 0.0
  %311 = vmatpush1.msra.mxu0 %v79
  %312 = vmatprep.subr.mxu0 0.0
  %313 = vmatpush1.msra.mxu0 %v78
  %314 = vmatprep.subr.mxu0 0.0
  %315 = vmatpush2.msra.mxu0 0.0
  %316 = vmatprep.subr.mxu0 0.0
  %317 = vmatpush2.msra.mxu0 0.0
  %318 = vmatprep.subr.mxu0 0.0
  %319 = vmatpush2.msra.mxu0 0.0
  %320 = vmatprep.subr.mxu0 0.0
  %321 = vmatpush2.msra.mxu0 0.0
  %322 = vmatprep.subr.mxu0 0.0
  %323 = vmatpush2.msra.mxu0 0.0
  %324 = vmatprep.subr.mxu0 0.0
  %325 = vmatpush2.msra.mxu0 0.0
  %326 = vmatprep.subr.mxu0 0.0
  %327 = vmatpush2.msra.mxu0 0.0
  %328 = vmatprep.subr.mxu0 0.0
  %329 = vmatpush2.msra.mxu0 0.0
  %330 = vmatprep.subr.mxu0 0.0
  %331 = vmatpush2.msra.mxu0 0.0
  %332 = vmatprep.subr.mxu0 0.0
  %333 = vmatpush2.msra.mxu0 0.0
  %334 = vmatprep.subr.mxu0 0.0
  %335 = vmatpush2.msra.mxu0 0.0
  %336 = vmatprep.subr.mxu0 0.0
  %337 = vmatpush2.msra.mxu0 0.0
  %338 = vmatprep.subr.mxu0 0.0
  %339 = vmatpush2.msra.mxu0 0.0
  %340 = vmatprep.subr.mxu0 0.0
  %341 = vmatpush2.msra.mxu0 0.0
  %342 = vmatprep.subr.mxu0 0.0
  %343 = vmatpush2.msra.mxu0 0.0
  %344 = vmatprep.subr.mxu0 0.0
  %345 = vmatpush2.msra.mxu0 0.0
  %346 = vmatprep.mubr.f32.mxu0 0.0
  %347 = vmatmul.mubr.f32.gmra.mxu0 %v91
  %v348 = vpop.f32.mrf.mxu0
  %v349 = vadd.f32 %v87, %v348
  %v350 = vpop.f32.mrf.mxu0
  %351 = vmatprep.mubr.f32.mxu0 0.0
  %352 = vmatmul.mubr.f32.gmra.mxu0 %v94
  %v353 = vpop.f32.mrf.mxu0
  %v354 = vadd.f32 %v87, %v353
  %v355 = vpop.f32.mrf.mxu0
  %356 = vmatprep.mubr.f32.mxu0 0.0
  %357 = vmatmul.mubr.f32.gmra.mxu0 %v97
  %v358 = vpop.f32.mrf.mxu0
  %v359 = vadd.f32 %v87, %v358
  %v360 = vpop.f32.mrf.mxu0
  %361 = vmatprep.mubr.f32.mxu0 0.0
  %362 = vmatmul.mubr.f32.gmra.mxu0 %v100
  %v363 = vpop.f32.mrf.mxu0
  %v364 = vadd.f32 %v87, %v363
  %v365 = vpop.f32.mrf.mxu0
  %366 = vmatprep.mubr.f32.mxu0 0.0
  %367 = vmatmul.mubr.f32.gmra.mxu0 %v103
  %v368 = vpop.f32.mrf.mxu0
  %v369 = vadd.f32 %v87, %v368
  %v370 = vpop.f32.mrf.mxu0
  %371 = vmatprep.mubr.f32.mxu0 0.0
  %372 = vmatmul.mubr.f32.gmra.mxu0 %v106
  %v373 = vpop.f32.mrf.mxu0
  %v374 = vadd.f32 %v87, %v373
  %v375 = vpop.f32.mrf.mxu0
  %376 = vmatprep.mubr.f32.mxu0 0.0
  %377 = vmatmul.mubr.f32.gmra.mxu0 %v109
  %v378 = vpop.f32.mrf.mxu0
  %v379 = vadd.f32 %v87, %v378
  %v380 = vpop.f32.mrf.mxu0
  %381 = vmatprep.mubr.f32.mxu0 0.0
  %382 = vmatmul.mubr.f32.gmra.mxu0 %v112
  %v383 = vpop.f32.mrf.mxu0
  %v384 = vadd.f32 %v87, %v383
  %v385 = vpop.f32.mrf.mxu0
  %386 = vmatprep.mubr.f32.mxu0 0.0
  %387 = vmatmul.mubr.f32.gmra.mxu0 %v115
  %v388 = vpop.f32.mrf.mxu0
  %v389 = vadd.f32 %v87, %v388
  %v390 = vpop.f32.mrf.mxu0
  %391 = vmatprep.mubr.f32.mxu0 0.0
  %392 = vmatmul.mubr.f32.gmra.mxu0 %v118
  %v393 = vpop.f32.mrf.mxu0
  %v394 = vadd.f32 %v87, %v393
  %v395 = vpop.f32.mrf.mxu0
  %396 = vmatprep.mubr.f32.mxu0 0.0
  %397 = vmatmul.mubr.f32.gmra.mxu0 %v121
  %v398 = vpop.f32.mrf.mxu0
  %v399 = vadd.f32 %v87, %v398
  %v400 = vpop.f32.mrf.mxu0
  %401 = vmatprep.mubr.f32.mxu0 0.0
  %402 = vmatmul.mubr.f32.gmra.mxu0 %v124
  %v403 = vpop.f32.mrf.mxu0
  %v404 = vadd.f32 %v87, %v403
  %v405 = vpop.f32.mrf.mxu0
  %406 = vmatprep.mubr.f32.mxu0 0.0
  %407 = vmatmul.mubr.f32.gmra.mxu0 %v127
  %v408 = vpop.f32.mrf.mxu0
  %v409 = vadd.f32 %v87, %v408
  %v410 = vpop.f32.mrf.mxu0
  %411 = vmatprep.mubr.f32.mxu0 0.0
  %412 = vmatmul.mubr.f32.gmra.mxu0 %v130
  %v413 = vpop.f32.mrf.mxu0
  %v414 = vadd.f32 %v87, %v413
  %v415 = vpop.f32.mrf.mxu0
  %416 = vmatprep.mubr.f32.mxu0 0.0
  %417 = vmatmul.mubr.f32.gmra.mxu0 %v133
  %v418 = vpop.f32.mrf.mxu0
  %v419 = vadd.f32 %v87, %v418
  %v420 = vpop.f32.mrf.mxu0
  %421 = vmatprep.mubr.f32.mxu0 0.0
  %422 = vmatmul.mubr.f32.gmra.mxu0 %v136
  %v423 = vpop.f32.mrf.mxu0
  %v424 = vadd.f32 %v87, %v423
  %v425 = vpop.f32.mrf.mxu0
  %426 = vmatprep.mubr.f32.mxu0 0.0
  %427 = vmatmul.mubr.f32.gmra.mxu0 %v139
  %v428 = vpop.f32.mrf.mxu0
  %v429 = vadd.f32 %v87, %v428
  %v430 = vpop.f32.mrf.mxu0
  %431 = vmatprep.mubr.f32.mxu0 0.0
  %432 = vmatmul.mubr.f32.gmra.mxu0 %v142
  %v433 = vpop.f32.mrf.mxu0
  %v434 = vadd.f32 %v87, %v433
  %v435 = vpop.f32.mrf.mxu0
  %436 = vmatprep.mubr.f32.mxu0 0.0
  %437 = vmatmul.mubr.f32.gmra.mxu0 %v145
  %v438 = vpop.f32.mrf.mxu0
  %v439 = vadd.f32 %v87, %v438
  %v440 = vpop.f32.mrf.mxu0
  %441 = vmatprep.mubr.f32.mxu0 0.0
  %442 = vmatmul.mubr.f32.gmra.mxu0 %v148
  %v443 = vpop.f32.mrf.mxu0
  %v444 = vadd.f32 %v87, %v443
  %v445 = vpop.f32.mrf.mxu0
  %446 = vmatprep.mubr.f32.mxu0 0.0
  %447 = vmatmul.mubr.f32.gmra.mxu0 %v151
  %v448 = vpop.f32.mrf.mxu0
  %v449 = vadd.f32 %v87, %v448
  %v450 = vpop.f32.mrf.mxu0
  %451 = vmatprep.mubr.f32.mxu0 0.0
  %452 = vmatmul.mubr.f32.gmra.mxu0 %v154
  %v453 = vpop.f32.mrf.mxu0
  %v454 = vadd.f32 %v87, %v453
  %v455 = vpop.f32.mrf.mxu0
  %456 = vmatprep.mubr.f32.mxu0 0.0
  %457 = vmatmul.mubr.f32.gmra.mxu0 %v157
  %v458 = vpop.f32.mrf.mxu0
  %v459 = vadd.f32 %v87, %v458
  %v460 = vpop.f32.mrf.mxu0
  %461 = vmatprep.mubr.f32.mxu0 0.0
  %462 = vmatmul.mubr.f32.gmra.mxu0 %v160
  %v463 = vpop.f32.mrf.mxu0
  %v464 = vadd.f32 %v87, %v463
  %v465 = vpop.f32.mrf.mxu0
  %466 = vmatprep.mubr.f32.mxu0 0.0
  %467 = vmatmul.mubr.f32.gmra.mxu0 %v163
  %v468 = vpop.f32.mrf.mxu0
  %v469 = vadd.f32 %v87, %v468
  %v470 = vpop.f32.mrf.mxu0
  %471 = vmatprep.mubr.f32.mxu0 0.0
  %472 = vmatmul.mubr.f32.gmra.mxu0 %v166
  %v473 = vpop.f32.mrf.mxu0
  %v474 = vadd.f32 %v87, %v473
  %v475 = vpop.f32.mrf.mxu0
  %476 = vmatprep.mubr.f32.mxu0 0.0
  %477 = vmatmul.mubr.f32.gmra.mxu0 %v169
  %v478 = vpop.f32.mrf.mxu0
  %v479 = vadd.f32 %v87, %v478
  %v480 = vpop.f32.mrf.mxu0
  %481 = vmatprep.mubr.f32.mxu0 0.0
  %482 = vmatmul.mubr.f32.gmra.mxu0 %v172
  %v483 = vpop.f32.mrf.mxu0
  %v484 = vadd.f32 %v87, %v483
  %v485 = vpop.f32.mrf.mxu0
  %486 = vmatprep.mubr.f32.mxu0 0.0
  %487 = vmatmul.mubr.f32.gmra.mxu0 %v175
  %v488 = vpop.f32.mrf.mxu0
  %v489 = vadd.f32 %v87, %v488
  %v490 = vpop.f32.mrf.mxu0
  %491 = vmatprep.mubr.f32.mxu0 0.0
  %492 = vmatmul.mubr.f32.gmra.mxu0 %v178
  %v493 = vpop.f32.mrf.mxu0
  %v494 = vadd.f32 %v87, %v493
  %v495 = vpop.f32.mrf.mxu0
  %496 = vmatprep.mubr.f32.mxu0 0.0
  %497 = vmatmul.mubr.f32.gmra.mxu0 %v181
  %v498 = vpop.f32.mrf.mxu0
  %v499 = vadd.f32 %v87, %v498
  %v500 = vpop.f32.mrf.mxu0
  %501 = vmatprep.mubr.f32.mxu0 0.0
  %502 = vmatmul.mubr.f32.gmra.mxu0 %v184
  %v503 = vpop.f32.mrf.mxu0
  %v504 = vadd.f32 %v87, %v503
  %v505 = vpop.f32.mrf.mxu0
  %506 = vmatprep.mubr.f32.mxu0 0.0
  %507 = vmatmul.mubr.f32.gmra.mxu0 %v187
  %v508 = vpop.f32.mrf.mxu0
  %v509 = vadd.f32 %v87, %v508
  %v510 = vpop.f32.mrf.mxu0
  %511 = vmatprep.mubr.f32.mxu0 0.0
  %512 = vmatmul.mubr.f32.gmra.mxu0 %v190
  %v513 = vpop.f32.mrf.mxu0
  %v514 = vadd.f32 %v87, %v513
  %v515 = vpop.f32.mrf.mxu0
  %516 = vmatprep.mubr.f32.mxu0 0.0
  %517 = vmatmul.mubr.f32.gmra.mxu0 %v193
  %v518 = vpop.f32.mrf.mxu0
  %v519 = vadd.f32 %v87, %v518
  %v520 = vpop.f32.mrf.mxu0
  %521 = vmatprep.mubr.f32.mxu0 0.0
  %522 = vmatmul.mubr.f32.gmra.mxu0 %v196
  %v523 = vpop.f32.mrf.mxu0
  %v524 = vadd.f32 %v87, %v523
  %v525 = vpop.f32.mrf.mxu0
  %526 = vmatprep.mubr.f32.mxu0 0.0
  %527 = vmatmul.mubr.f32.gmra.mxu0 %v199
  %v528 = vpop.f32.mrf.mxu0
  %v529 = vadd.f32 %v87, %v528
  %v530 = vpop.f32.mrf.mxu0
  %531 = vmatprep.mubr.f32.mxu0 0.0
  %532 = vmatmul.mubr.f32.gmra.mxu0 %v202
  %v533 = vpop.f32.mrf.mxu0
  %v534 = vadd.f32 %v87, %v533
  %v535 = vpop.f32.mrf.mxu0
  %536 = vmatprep.mubr.f32.mxu0 0.0
  %537 = vmatmul.mubr.f32.gmra.mxu0 %v205
  %v538 = vpop.f32.mrf.mxu0
  %v539 = vadd.f32 %v87, %v538
  %v540 = vpop.f32.mrf.mxu0
  %541 = vmatprep.mubr.f32.mxu0 0.0
  %542 = vmatmul.mubr.f32.gmra.mxu0 %v208
  %v543 = vpop.f32.mrf.mxu0
  %v544 = vadd.f32 %v87, %v543
  %v545 = vpop.f32.mrf.mxu0
  %546 = vmatprep.mubr.f32.mxu0 0.0
  %547 = vmatmul.mubr.f32.gmra.mxu0 %v211
  %v548 = vpop.f32.mrf.mxu0
  %v549 = vadd.f32 %v87, %v548
  %v550 = vpop.f32.mrf.mxu0
  %551 = vmatprep.mubr.f32.mxu0 0.0
  %552 = vmatmul.mubr.f32.gmra.mxu0 %v214
  %v553 = vpop.f32.mrf.mxu0
  %v554 = vadd.f32 %v87, %v553
  %v555 = vpop.f32.mrf.mxu0
  %556 = vmatprep.mubr.f32.mxu0 0.0
  %557 = vmatmul.mubr.f32.gmra.mxu0 %v217
  %v558 = vpop.f32.mrf.mxu0
  %v559 = vadd.f32 %v87, %v558
  %v560 = vpop.f32.mrf.mxu0
  %561 = vmatprep.mubr.f32.mxu0 0.0
  %562 = vmatmul.mubr.f32.gmra.mxu0 %v220
  %v563 = vpop.f32.mrf.mxu0
  %v564 = vadd.f32 %v87, %v563
  %v565 = vpop.f32.mrf.mxu0
  %566 = vmatprep.mubr.f32.mxu0 0.0
  %567 = vmatmul.mubr.f32.gmra.mxu0 %v223
  %v568 = vpop.f32.mrf.mxu0
  %v569 = vadd.f32 %v87, %v568
  %v570 = vpop.f32.mrf.mxu0
  %571 = vmatprep.mubr.f32.mxu0 0.0
  %572 = vmatmul.mubr.f32.gmra.mxu0 %v226
  %v573 = vpop.f32.mrf.mxu0
  %v574 = vadd.f32 %v87, %v573
  %v575 = vpop.f32.mrf.mxu0
  %576 = vmatprep.mubr.f32.mxu0 0.0
  %577 = vmatmul.mubr.f32.gmra.mxu0 %v229
  %v578 = vpop.f32.mrf.mxu0
  %v579 = vadd.f32 %v87, %v578
  %v580 = vpop.f32.mrf.mxu0
  %581 = vmatprep.mubr.f32.mxu0 0.0
  %582 = vmatmul.mubr.f32.gmra.mxu0 %v232
  %v583 = vpop.f32.mrf.mxu0
  %v584 = vadd.f32 %v87, %v583
  %v585 = vpop.f32.mrf.mxu0
  %586 = vmatprep.mubr.f32.mxu0 0.0
  %587 = vmatmul.mubr.f32.gmra.mxu0 %v235
  %v588 = vpop.f32.mrf.mxu0
  %v589 = vadd.f32 %v87, %v588
  %v590 = vpop.f32.mrf.mxu0
  %591 = vmatprep.mubr.f32.mxu0 0.0
  %592 = vmatmul.mubr.f32.gmra.mxu0 %v238
  %v593 = vpop.f32.mrf.mxu0
  %v594 = vadd.f32 %v87, %v593
  %v595 = vpop.f32.mrf.mxu0
  %596 = vmatprep.mubr.f32.mxu0 0.0
  %597 = vmatmul.mubr.f32.gmra.mxu0 %v241
  %v598 = vpop.f32.mrf.mxu0
  %v599 = vadd.f32 %v87, %v598
  %v600 = vpop.f32.mrf.mxu0
  %601 = vmatprep.mubr.f32.mxu0 0.0
  %602 = vmatmul.mubr.f32.gmra.mxu0 %v244
  %v603 = vpop.f32.mrf.mxu0
  %v604 = vadd.f32 %v87, %v603
  %v605 = vpop.f32.mrf.mxu0
  %606 = vmatprep.mubr.f32.mxu0 0.0
  %607 = vmatmul.mubr.f32.gmra.mxu0 %v247
  %v608 = vpop.f32.mrf.mxu0
  %v609 = vadd.f32 %v87, %v608
  %v610 = vpop.f32.mrf.mxu0
  %611 = vmatprep.mubr.f32.mxu0 0.0
  %612 = vmatmul.mubr.f32.gmra.mxu0 %v250
  %v613 = vpop.f32.mrf.mxu0
  %v614 = vadd.f32 %v87, %v613
  %v615 = vpop.f32.mrf.mxu0
  %616 = vmatprep.mubr.f32.mxu0 0.0
  %617 = vmatmul.mubr.f32.gmra.mxu0 %v253
  %v618 = vpop.f32.mrf.mxu0
  %v619 = vadd.f32 %v87, %v618
  %v620 = vpop.f32.mrf.mxu0
  %621 = vmatprep.mubr.f32.mxu0 0.0
  %622 = vmatmul.mubr.f32.gmra.mxu0 %v256
  %v623 = vpop.f32.mrf.mxu0
  %v624 = vadd.f32 %v87, %v623
  %v625 = vpop.f32.mrf.mxu0
  %626 = vmatprep.mubr.f32.mxu0 0.0
  %627 = vmatmul.mubr.f32.gmra.mxu0 %v259
  %v628 = vpop.f32.mrf.mxu0
  %v629 = vadd.f32 %v87, %v628
  %v630 = vpop.f32.mrf.mxu0
  %631 = vmatprep.mubr.f32.mxu0 0.0
  %632 = vmatmul.mubr.f32.gmra.mxu0 %v262
  %v633 = vpop.f32.mrf.mxu0
  %v634 = vadd.f32 %v87, %v633
  %v635 = vpop.f32.mrf.mxu0
  %636 = vmatprep.mubr.f32.mxu0 0.0
  %637 = vmatmul.mubr.f32.gmra.mxu0 %v265
  %v638 = vpop.f32.mrf.mxu0
  %v639 = vadd.f32 %v87, %v638
  %v640 = vpop.f32.mrf.mxu0
  %641 = vmatprep.mubr.f32.mxu0 0.0
  %642 = vmatmul.mubr.f32.gmra.mxu0 %v268
  %v643 = vpop.f32.mrf.mxu0
  %v644 = vadd.f32 %v87, %v643
  %v645 = vpop.f32.mrf.mxu0
  %646 = vmatprep.mubr.f32.mxu0 0.0
  %647 = vmatmul.mubr.f32.gmra.mxu0 %v271
  %v648 = vpop.f32.mrf.mxu0
  %v649 = vadd.f32 %v87, %v648
  %v650 = vpop.f32.mrf.mxu0
  %651 = vmatprep.mubr.f32.mxu0 0.0
  %652 = vmatmul.mubr.f32.gmra.mxu0 %v274
  %v653 = vpop.f32.mrf.mxu0
  %v654 = vadd.f32 %v87, %v653
  %v655 = vpop.f32.mrf.mxu0
  %656 = vmatprep.mubr.f32.mxu0 0.0
  %657 = vmatmul.mubr.f32.gmra.mxu0 %v277
  %v658 = vpop.f32.mrf.mxu0
  %v659 = vadd.f32 %v87, %v658
  %v660 = vpop.f32.mrf.mxu0
  %661 = vmatprep.mubr.f32.mxu0 0.0
  %662 = vmatmul.mubr.f32.gmra.mxu0 %v280
  %v663 = vpop.f32.mrf.mxu0
  %v664 = vadd.f32 %v87, %v663
  %v665 = vpop.f32.mrf.mxu0
  %666 = vdwg.mxu0
  %667 = vst.msk [vmem:[%s3] sm:$0xff] %vm89, %v349
  %668 = vst.msk [vmem:[%s3 + $0x8] sm:$0xff] %vm89, %v354
  %669 = vst.msk [vmem:[%s3 + $0x10] sm:$0xff] %vm89, %v359
  %670 = vst.msk [vmem:[%s3 + $0x18] sm:$0xff] %vm89, %v364
  %671 = vst.msk [vmem:[%s3 + $0x20] sm:$0xff] %vm89, %v369
  %672 = vst.msk [vmem:[%s3 + $0x28] sm:$0xff] %vm89, %v374
  %673 = vst.msk [vmem:[%s3 + $0x30] sm:$0xff] %vm89, %v379
  %674 = vst.msk [vmem:[%s3 + $0x38] sm:$0xff] %vm89, %v384
  %675 = vst.msk [vmem:[%s3 + $0x40] sm:$0xff] %vm89, %v389
  %676 = vst.msk [vmem:[%s3 + $0x48] sm:$0xff] %vm89, %v394
  %677 = vst.msk [vmem:[%s3 + $0x50] sm:$0xff] %vm89, %v399
  %678 = vst.msk [vmem:[%s3 + $0x58] sm:$0xff] %vm89, %v404
  %679 = vst.msk [vmem:[%s3 + $0x60] sm:$0xff] %vm89, %v409
  %680 = vst.msk [vmem:[%s3 + $0x68] sm:$0xff] %vm89, %v414
  %681 = vst.msk [vmem:[%s3 + $0x70] sm:$0xff] %vm89, %v419
  %682 = vst.msk [vmem:[%s3 + $0x78] sm:$0xff] %vm89, %v424
  %683 = vst.msk [vmem:[%s3 + $0x80] sm:$0xff] %vm89, %v429
  %684 = vst.msk [vmem:[%s3 + $0x88] sm:$0xff] %vm89, %v434
  %685 = vst.msk [vmem:[%s3 + $0x90] sm:$0xff] %vm89, %v439
  %686 = vst.msk [vmem:[%s3 + $0x98] sm:$0xff] %vm89, %v444
  %687 = vst.msk [vmem:[%s3 + $0xa0] sm:$0xff] %vm89, %v449
  %688 = vst.msk [vmem:[%s3 + $0xa8] sm:$0xff] %vm89, %v454
  %689 = vst.msk [vmem:[%s3 + $0xb0] sm:$0xff] %vm89, %v459
  %690 = vst.msk [vmem:[%s3 + $0xb8] sm:$0xff] %vm89, %v464
  %691 = vst.msk [vmem:[%s3 + $0xc0] sm:$0xff] %vm89, %v469
  %692 = vst.msk [vmem:[%s3 + $0xc8] sm:$0xff] %vm89, %v474
  %693 = vst.msk [vmem:[%s3 + $0xd0] sm:$0xff] %vm89, %v479
  %694 = vst.msk [vmem:[%s3 + $0xd8] sm:$0xff] %vm89, %v484
  %695 = vst.msk [vmem:[%s3 + $0xe0] sm:$0xff] %vm89, %v489
  %696 = vst.msk [vmem:[%s3 + $0xe8] sm:$0xff] %vm89, %v494
  %697 = vst.msk [vmem:[%s3 + $0xf0] sm:$0xff] %vm89, %v499
  %698 = vst.msk [vmem:[%s3 + $0xf8] sm:$0xff] %vm89, %v504
  %699 = vst.msk [vmem:[%s3 + $0x100] sm:$0xff] %vm89, %v509
  %700 = vst.msk [vmem:[%s3 + $0x108] sm:$0xff] %vm89, %v514
  %701 = vst.msk [vmem:[%s3 + $0x110] sm:$0xff] %vm89, %v519
  %702 = vst.msk [vmem:[%s3 + $0x118] sm:$0xff] %vm89, %v524
  %703 = vst.msk [vmem:[%s3 + $0x120] sm:$0xff] %vm89, %v529
  %704 = vst.msk [vmem:[%s3 + $0x128] sm:$0xff] %vm89, %v534
  %705 = vst.msk [vmem:[%s3 + $0x130] sm:$0xff] %vm89, %v539
  %706 = vst.msk [vmem:[%s3 + $0x138] sm:$0xff] %vm89, %v544
  %707 = vst.msk [vmem:[%s3 + $0x140] sm:$0xff] %vm89, %v549
  %708 = vst.msk [vmem:[%s3 + $0x148] sm:$0xff] %vm89, %v554
  %709 = vst.msk [vmem:[%s3 + $0x150] sm:$0xff] %vm89, %v559
  %710 = vst.msk [vmem:[%s3 + $0x158] sm:$0xff] %vm89, %v564
  %711 = vst.msk [vmem:[%s3 + $0x160] sm:$0xff] %vm89, %v569
  %712 = vst.msk [vmem:[%s3 + $0x168] sm:$0xff] %vm89, %v574
  %713 = vst.msk [vmem:[%s3 + $0x170] sm:$0xff] %vm89, %v579
  %714 = vst.msk [vmem:[%s3 + $0x178] sm:$0xff] %vm89, %v584
  %715 = vst.msk [vmem:[%s3 + $0x180] sm:$0xff] %vm89, %v589
  %716 = vst.msk [vmem:[%s3 + $0x188] sm:$0xff] %vm89, %v594
  %717 = vst.msk [vmem:[%s3 + $0x190] sm:$0xff] %vm89, %v599
  %718 = vst.msk [vmem:[%s3 + $0x198] sm:$0xff] %vm89, %v604
  %719 = vst.msk [vmem:[%s3 + $0x1a0] sm:$0xff] %vm89, %v609
  %720 = vst.msk [vmem:[%s3 + $0x1a8] sm:$0xff] %vm89, %v614
  %721 = vst.msk [vmem:[%s3 + $0x1b0] sm:$0xff] %vm89, %v619
  %722 = vst.msk [vmem:[%s3 + $0x1b8] sm:$0xff] %vm89, %v624
  %723 = vst.msk [vmem:[%s3 + $0x1c0] sm:$0xff] %vm89, %v629
  %724 = vst.msk [vmem:[%s3 + $0x1c8] sm:$0xff] %vm89, %v634
  %725 = vst.msk [vmem:[%s3 + $0x1d0] sm:$0xff] %vm89, %v639
  %726 = vst.msk [vmem:[%s3 + $0x1d8] sm:$0xff] %vm89, %v644
  %727 = vst.msk [vmem:[%s3 + $0x1e0] sm:$0xff] %vm89, %v649
  %728 = vst.msk [vmem:[%s3 + $0x1e8] sm:$0xff] %vm89, %v654
  %729 = vst.msk [vmem:[%s3 + $0x1f0] sm:$0xff] %vm89, %v659
  %730 = vst.msk [vmem:[%s3 + $0x1f8] sm:$0xff] %vm89, %v664
  // Predicated region
  $region14: #{tpu_custom_call.1} parent=0 // pred_check
    _
  $region15: #{tpu_custom_call.1} parent=0 // pred_check_branch
    %732 = sbr.rel (0) target = $region17
  $region16: #{tpu_custom_call.1} parent=0 // pred_region
    _
  $region17: #{tpu_custom_call.1} parent=0 // pred_fallthru
    _
  // Predicated region
  $region18: #{tpu_custom_call.1} parent=0 // pred_check
    _
  $region19: #{tpu_custom_call.1} parent=0 // pred_check_branch
    %734 = sbr.rel (0) target = $region21
  $region20: #{tpu_custom_call.1} parent=0 // pred_region
    _
  $region21: #{tpu_custom_call.1} parent=0 // pred_fallthru
    _

</llo_original>
